<compile_context>
chip_gen: v6e
topology: v6e:2x2x1
jax: 0.10.0
libtpu: 0.0.40
codegen_flags: <defaults>
</compile_context>

<pallas_src>
import numpy as np
import jax
import jax.numpy as jnp
from jax.experimental import pallas as pl
from jax.experimental.pallas import tpu as pltpu

_EPS = 1e-5
_NEG_SLOPE = 0.3
_LANE = 128


# --------------------------------------------------------------------------------------
# Fused kernel
# --------------------------------------------------------------------------------------
def _make_encoder_kernel(meta):
    """meta: tuple of per-layer dicts of static ints (shapes, packed-constant offsets)."""
    n_layers = len(meta)

    def kernel(x_ref, v_ref, c_ref, o_ref, *scratch):
        p_refs = scratch[:n_layers]                       # im2col patch buffers (per layer)
        act_refs = scratch[n_layers:2 * n_layers - 1]     # inter-layer activations
        stk_ref = scratch[-1]                             # (2, lanes) BN stacking buffer

        for l, m in enumerate(meta):
            src = x_ref if l == 0 else act_refs[l - 1]
            p_ref = p_refs[l]
            N, Hin, Ho, Wo, Cp = m["n"], m["h_in"], m["ho"], m["wo"], m["c_p"]
            wc_in = m["w_in"] * m["c_in"]

            # ---- im2col rows via stride-2 sublane gather (no matmul, O(N) constants) ----
            for ni in range(N):
                for kh in range(3):
                    rows = (pl.ds(ni * Hin + kh, Ho, stride=2) if Ho > 1
                            else pl.ds(ni * Hin + kh, 1))
                    p_ref[pl.ds(ni * Ho, Ho), pl.ds(kh * wc_in, wc_in)] = src[rows, :]

            # ---- conv k3/s2/valid/no-bias: ONE MXU dot (bf16 operands, f32 accumulate) ---
            v = v_ref[pl.ds(m["v_off"], m["v_rows"]), pl.ds(0, m["v_cols"])]
            y = jnp.dot(p_ref[...].astype(jnp.bfloat16), v,
                        preferred_element_type=jnp.float32)        # (N*Ho, Wo*Cp) f32

            # ---- BatchNorm2d (train-mode batch stats, biased var), f32 throughout -------
            inv_cnt = 1.0 / m["count"]
            s1 = jnp.sum(y, axis=0, keepdims=True)                 # (1, Wo*Cp)
            s2 = jnp.sum(y * y, axis=0, keepdims=True)
            gamma = c_ref[pl.ds(m["g_off"], 1), pl.ds(0, Cp)]      # (1, Cp)
            beta = c_ref[pl.ds(m["b_off"], 1), pl.ds(0, Cp)]
            if Wo > 1:
                wcp = Wo * Cp
                # collapse per-w column groups -> per-channel moments with ONE dot
                stk_ref[pl.ds(0, 1), pl.ds(0, wcp)] = s1
                stk_ref[pl.ds(1, 1), pl.ds(0, wcp)] = s2
                gc = c_ref[pl.ds(m["gc_off"], wcp), pl.ds(0, Cp)]
                mom = jnp.dot(stk_ref[pl.ds(0, 2), pl.ds(0, wcp)], gc,
                              preferred_element_type=jnp.float32) * inv_cnt    # (2, Cp)
                mean_c = mom[0:1, :]
                var_c = jnp.maximum(mom[1:2, :] - mean_c * mean_c, 0.0)
                scale_c = gamma * jax.lax.rsqrt(var_c + _EPS)
                shift_c = beta - mean_c * scale_c
                # broadcast per-channel scale/shift back to columns with ONE dot
                stk_ref[pl.ds(0, 1), pl.ds(0, Cp)] = scale_c
                stk_ref[pl.ds(1, 1), pl.ds(0, Cp)] = shift_c
                bc = c_ref[pl.ds(m["bc_off"], Cp), pl.ds(0, wcp)]
                cols = jnp.dot(stk_ref[pl.ds(0, 2), pl.ds(0, Cp)], bc,
                               preferred_element_type=jnp.float32)             # (2, Wo*Cp)
                scale, shift = cols[0:1, :], cols[1:2, :]
            else:
                # Wo == 1: columns already per-channel -> skip the gc/bc dots entirely
                mean = s1 * inv_cnt
                var = jnp.maximum(s2 * inv_cnt - mean * mean, 0.0)
                scale = gamma * jax.lax.rsqrt(var + _EPS)
                shift = beta - mean * scale

            z = y * scale + shift                                  # single VPU affine pass
            a_out = jnp.where(z >= 0, z, _NEG_SLOPE * z)           # LeakyReLU(0.3)

            if l == n_layers - 1:
                o_ref[...] = a_out                                 # lane-dense final store
            else:
                act_refs[l][...] = a_out

    return kernel


# --------------------------------------------------------------------------------------
# Wrapper-side constant construction (fold conv weights + kw/stride selection; BN one-hots)
# --------------------------------------------------------------------------------------
def _build_constants(params, n, h, w, cin):
    """Returns (meta, packed_bf16_weights, packed_f32_consts, (Ho_last, Wo_last, Cp_last)).

    For frozen (inference-style) parameters this can be hoisted out of the per-step jit."""
    meta = []
    v_blocks, f_blocks = [], []
    v_off = f_off = 0
    cur_h, cur_w, cur_c = h, w, cin
    n_layers = len(params)

    for li, (w_hwio, gamma, beta) in enumerate(params):
        cout = int(w_hwio.shape[-1])
        ho = (cur_h - 3) // 2 + 1
        wo = (cur_w - 3) // 2 + 1
        last = (li == n_layers - 1)
        cp = (-(-cout // _LANE)) * _LANE if last else cout          # lane-pad final layer only

        # Stride-2 kw placement one-hot: place[kw, w, j] = 1 iff w == 2*j + kw
        place = np.zeros((3, cur_w, wo), np.float32)
        for kw in range(3):
            for j in range(wo):
                place[kw, 2 * j + kw, j] = 1.0

        w_p = w_hwio.astype(jnp.float32)
        if cp != cout:
            w_p = jnp.pad(w_p, ((0, 0), (0, 0), (0, 0), (0, cp - cout)))
        # V[(kh*W + w)*Cin + ci, j*Cp + co] = W[kh, w - 2j, ci, co]  (0 <= w - 2j <= 2)
        v = jnp.einsum('xwj,kxic->kwijc', place, w_p).reshape(3 * cur_w * cur_c, wo * cp)

        m = dict(n=n, h_in=cur_h, w_in=cur_w, c_in=cur_c, ho=ho, wo=wo,
                 c_out=cout, c_p=cp, count=n * ho * wo,
                 v_off=v_off, v_rows=3 * cur_w * cur_c, v_cols=wo * cp)
        v_blocks.append(v.astype(jnp.bfloat16))
        v_off += m["v_rows"]

        g_p = gamma.astype(jnp.float32)
        b_p = beta.astype(jnp.float32)
        if cp != cout:
            g_p = jnp.pad(g_p, (0, cp - cout))
            b_p = jnp.pad(b_p, (0, cp - cout))
        if wo > 1:
            gc = np.tile(np.eye(cp, dtype=np.float32), (wo, 1))     # (wo*cp, cp) collapse
            bc = np.ascontiguousarray(gc.T)                          # (cp, wo*cp) broadcast
            m["gc_off"] = f_off; f_blocks.append(jnp.asarray(gc)); f_off += wo * cp
            m["bc_off"] = f_off; f_blocks.append(jnp.asarray(bc)); f_off += cp
        m["g_off"] = f_off; f_blocks.append(g_p.reshape(1, cp)); f_off += 1
        m["b_off"] = f_off; f_blocks.append(b_p.reshape(1, cp)); f_off += 1

        meta.append(m)
        cur_h, cur_w, cur_c = ho, wo, cp

    width = max([_LANE] + [int(b.shape[1]) for b in v_blocks + f_blocks])

    def pack(blocks, dtype):
        padded = [jnp.pad(b, ((0, 0), (0, width - b.shape[1]))).astype(dtype) for b in blocks]
        return jnp.concatenate(padded, axis=0)

    vbuf = pack(v_blocks, jnp.bfloat16)          # folded conv weights (matmul operands)
    fbuf = pack(f_blocks, jnp.float32)           # BN one-hots + gamma/beta (f32 path)
    return tuple(meta), vbuf, fbuf, (cur_h, cur_w, cur_c)


# --------------------------------------------------------------------------------------
# Forward pass (single pallas_call)
# --------------------------------------------------------------------------------------
def encoder_small_cnn(x_nchw, params):
    """EncoderSmallCnn forward.  Returns (flat, None, None) like the PyTorch module."""
    n, cin, h, w = x_nchw.shape
    if cin == 1:
        a0 = x_nchw.reshape(n * h, w).astype(jnp.float32)           # no transpose needed
    else:
        a0 = jnp.transpose(x_nchw, (0, 2, 3, 1)).reshape(n * h, w * cin).astype(jnp.float32)

    meta, vbuf, fbuf, (ho_l, wo_l, cp_l) = _build_constants(params, n, h, w, cin)
    n_layers = len(meta)
    out_rows, out_cols = n * ho_l, wo_l * cp_l

    def full_spec(arr):
        zeros = (0,) * arr.ndim
        return pl.BlockSpec(arr.shape, lambda i, _z=zeros: _z)

    scratch = []
    for m in meta:                                # im2col patch buffers
        scratch.append(pltpu.VMEM((m["n"] * m["ho"], 3 * m["w_in"] * m["c_in"]), jnp.float32))
    for m in meta[:-1]:                           # inter-layer activations
        scratch.append(pltpu.VMEM((m["n"] * m["ho"], m["wo"] * m["c_p"]), jnp.float32))
    stk_cols = max([_LANE] + [m["wo"] * m["c_p"] for m in meta if m["wo"] > 1])
    scratch.append(pltpu.VMEM((2, stk_cols), jnp.float32))          # BN stacking buffer

    out2d = pl.pallas_call(
        _make_encoder_kernel(meta),
        out_shape=jax.ShapeDtypeStruct((out_rows, out_cols), jnp.float32),
        grid=(1,),
        in_specs=[full_spec(a0), full_spec(vbuf), full_spec(fbuf)],
        out_specs=pl.BlockSpec((out_rows, out_cols), lambda i: (0, 0)),
        scratch_shapes=scratch,
        compiler_params=pltpu.CompilerParams(dimension_semantics=("arbitrary",)),
    )(a0, vbuf, fbuf)

    c_last = int(params[-1][0].shape[-1])
    if ho_l == 1 and wo_l == 1:
        # Final spatial is 1x1 (16x16 input): NCHW .view(N, -1) == channel slice; no transpose.
        out = out2d[:, :c_last]
    else:
        out = out2d.reshape(n, ho_l, wo_l, cp_l)[..., :c_last]
        out = jnp.transpose(out, (0, 3, 1, 2)).reshape(n, -1)       # PyTorch NCHW flatten order
    return out, None, None


# --------------------------------------------------------------------------------------
# Parameters + pure-JAX reference (for correctness check)
# --------------------------------------------------------------------------------------
def init_params(key, encoded_size):
    n_out = encoded_size // 4
    chans = [(1, n_out // 4), (n_out // 4, n_out // 2), (n_out // 2, n_out)]
    params = []
    for cin, cout in chans:
        key, sub = jax.random.split(key)
        fan_in = cin * 9
        w = jax.random.normal(sub, (3, 3, cin, cout), jnp.float32) * (2.0 / fan_in) ** 0.5
        gamma = jnp.ones((cout,), jnp.float32)     # nn.BatchNorm2d default weight
        beta = jnp.zeros((cout,), jnp.float32)     # nn.BatchNorm2d default bias
        params.append((w, gamma, beta))
    return params


def _reference_forward(x_nchw, params):
    x = x_nchw.astype(jnp.float32)
    for w_hwio, gamma, beta in params:
        w_oihw = jnp.transpose(w_hwio, (3, 2, 0, 1))
        y = jax.lax.conv_general_dilated(
            x, w_oihw, window_strides=(2, 2), padding='VALID',
            dimension_numbers=('NCHW', 'OIHW', 'NCHW'))
        mean = jnp.mean(y, axis=(0, 2, 3), keepdims=True)
        var = jnp.mean(jnp.square(y - mean), axis=(0, 2, 3), keepdims=True)
        y = (y - mean) * jax.lax.rsqrt(var + _EPS)
        y = y * gamma.reshape(1, -1, 1, 1) + beta.reshape(1, -1, 1, 1)
        x = jnp.where(y >= 0, y, _NEG_SLOPE * y)
    return x.reshape(x.shape[0], -1)


# --------------------------------------------------------------------------------------
if __name__ == "__main__":
    key = jax.random.PRNGKey(0)
    k_x, k_p = jax.random.split(key)

    encoded_size = 64                                          # n_maps_output=16 -> 4, 8, 16
    x = jax.random.normal(k_x, (2, 1, 16, 16), jnp.float32)    # NCHW; spatial 16 -> 7 -> 3 -> 1
    params = init_params(k_p, encoded_size)

    fwd = jax.jit(encoder_small_cnn)
    out, aux_a, aux_b = fwd(x, params)
    jax.block_until_ready(out)
    assert out.shape == (2, encoded_size // 4) and aux_a is None and aux_b is None

    ref = _reference_forward(x, params)
    # Tolerance 2e-2: conv matmul operands are bf16 (single MXU pass); BN stats stay f32.
    np.testing.assert_allclose(np.asarray(out), np.asarray(ref), rtol=2e-2, atol=2e-2)
    print("KERNEL_OK")
</pallas_src>

<mosaic_0001>
module attributes {stable_mosaic.version = 11 : i64} {
  func.func @kernel(%arg0: i32, %arg1: memref<32x16xf32, #tpu.memory_space<vmem>>, %arg2: memref<204x128xbf16, #tpu.memory_space<vmem>>, %arg3: memref<70x128xf32, #tpu.memory_space<vmem>>, %arg4: memref<2x128xf32, #tpu.memory_space<vmem>>, %arg5: memref<14x48xf32, #tpu.memory_space<vmem>>, %arg6: memref<6x84xf32, #tpu.memory_space<vmem>>, %arg7: memref<2x72xf32, #tpu.memory_space<vmem>>, %arg8: memref<14x28xf32, #tpu.memory_space<vmem>>, %arg9: memref<6x24xf32, #tpu.memory_space<vmem>>, %arg10: memref<2x128xf32, #tpu.memory_space<vmem>>) attributes {dimension_semantics = [#tpu.dimension_semantics<arbitrary>], iteration_bounds = array<i64: 1>, scalar_prefetch = 0 : i64, scratch_operands = 6 : i64, tpu.core_type = #tpu.core_type<tc>, window_params = [{pipeline_mode = #tpu.pipeline_mode<synchronous>, transform_indices = @transform_0, window_bounds = array<i64: 32, 16>}, {pipeline_mode = #tpu.pipeline_mode<synchronous>, transform_indices = @transform_1, window_bounds = array<i64: 204, 128>}, {pipeline_mode = #tpu.pipeline_mode<synchronous>, transform_indices = @transform_2, window_bounds = array<i64: 70, 128>}, {pipeline_mode = #tpu.pipeline_mode<synchronous>, transform_indices = @transform_3, window_bounds = array<i64: 2, 128>}]} {
    %c0 = arith.constant 0 : index
    %c0_0 = arith.constant 0 : index
    %0 = tpu.strided_load %arg1[%c0, %c0_0] {strides = array<i32: 2, 1>} : memref<32x16xf32, #tpu.memory_space<vmem>>, vector<7x16xf32>
    %c0_1 = arith.constant 0 : index
    %c0_2 = arith.constant 0 : index
    %1 = vector.load %arg5[%c0_1, %c0_2] : memref<14x48xf32, #tpu.memory_space<vmem>>, vector<7x16xf32>
    tpu.vector_store %arg5[%c0_1, %c0_2], %0 {strides = array<i32>} : memref<14x48xf32, #tpu.memory_space<vmem>>, vector<7x16xf32>,
    %c1 = arith.constant 1 : index
    %c0_3 = arith.constant 0 : index
    %2 = tpu.strided_load %arg1[%c1, %c0_3] {strides = array<i32: 2, 1>} : memref<32x16xf32, #tpu.memory_space<vmem>>, vector<7x16xf32>
    %c0_4 = arith.constant 0 : index
    %c16 = arith.constant 16 : index
    %3 = vector.load %arg5[%c0_4, %c16] : memref<14x48xf32, #tpu.memory_space<vmem>>, vector<7x16xf32>
    tpu.vector_store %arg5[%c0_4, %c16], %2 {strides = array<i32>} : memref<14x48xf32, #tpu.memory_space<vmem>>, vector<7x16xf32>,
    %c2 = arith.constant 2 : index
    %c0_5 = arith.constant 0 : index
    %4 = tpu.strided_load %arg1[%c2, %c0_5] {strides = array<i32: 2, 1>} : memref<32x16xf32, #tpu.memory_space<vmem>>, vector<7x16xf32>
    %c0_6 = arith.constant 0 : index
    %c32 = arith.constant 32 : index
    %5 = vector.load %arg5[%c0_6, %c32] : memref<14x48xf32, #tpu.memory_space<vmem>>, vector<7x16xf32>
    tpu.vector_store %arg5[%c0_6, %c32], %4 {strides = array<i32>} : memref<14x48xf32, #tpu.memory_space<vmem>>, vector<7x16xf32>,
    %c16_7 = arith.constant 16 : index
    %c0_8 = arith.constant 0 : index
    %6 = tpu.strided_load %arg1[%c16_7, %c0_8] {strides = array<i32: 2, 1>} : memref<32x16xf32, #tpu.memory_space<vmem>>, vector<7x16xf32>
    %c7 = arith.constant 7 : index
    %c0_9 = arith.constant 0 : index
    %7 = vector.load %arg5[%c7, %c0_9] : memref<14x48xf32, #tpu.memory_space<vmem>>, vector<7x16xf32>
    tpu.vector_store %arg5[%c7, %c0_9], %6 {strides = array<i32>} : memref<14x48xf32, #tpu.memory_space<vmem>>, vector<7x16xf32>,
    %c17 = arith.constant 17 : index
    %c0_10 = arith.constant 0 : index
    %8 = tpu.strided_load %arg1[%c17, %c0_10] {strides = array<i32: 2, 1>} : memref<32x16xf32, #tpu.memory_space<vmem>>, vector<7x16xf32>
    %c7_11 = arith.constant 7 : index
    %c16_12 = arith.constant 16 : index
    %9 = vector.load %arg5[%c7_11, %c16_12] : memref<14x48xf32, #tpu.memory_space<vmem>>, vector<7x16xf32>
    tpu.vector_store %arg5[%c7_11, %c16_12], %8 {strides = array<i32>} : memref<14x48xf32, #tpu.memory_space<vmem>>, vector<7x16xf32>,
    %c18 = arith.constant 18 : index
    %c0_13 = arith.constant 0 : index
    %10 = tpu.strided_load %arg1[%c18, %c0_13] {strides = array<i32: 2, 1>} : memref<32x16xf32, #tpu.memory_space<vmem>>, vector<7x16xf32>
    %c7_14 = arith.constant 7 : index
    %c32_15 = arith.constant 32 : index
    %11 = vector.load %arg5[%c7_14, %c32_15] : memref<14x48xf32, #tpu.memory_space<vmem>>, vector<7x16xf32>
    tpu.vector_store %arg5[%c7_14, %c32_15], %10 {strides = array<i32>} : memref<14x48xf32, #tpu.memory_space<vmem>>, vector<7x16xf32>,
    %c0_16 = arith.constant 0 : index
    %c0_17 = arith.constant 0 : index
    %12 = vector.load %arg2[%c0_16, %c0_17] : memref<204x128xbf16, #tpu.memory_space<vmem>>, vector<48x28xbf16>
    %c0_18 = arith.constant 0 : index
    %c0_19 = arith.constant 0 : index
    %13 = vector.load %arg5[%c0_18, %c0_19] : memref<14x48xf32, #tpu.memory_space<vmem>>, vector<14x48xf32>
    %14 = arith.truncf %13 : vector<14x48xf32> to vector<14x48xbf16>
    %cst = arith.constant dense<0.000000e+00> : vector<14x28xf32>
    %15 = tpu.matmul %14, %12, %cst {dimension_numbers = #tpu.dot_dimension_numbers<[1], [0], [0], [1], [0, 0, 1, 1], [], []>} : vector<14x48xbf16>, vector<48x28xbf16>, vector<14x28xf32> -> vector<14x28xf32>
    %cst_20 = arith.constant dense<0.000000e+00> : vector<28xf32>
    %16 = vector.multi_reduction <add>, %15, %cst_20 [0] : vector<14x28xf32> to vector<28xf32>
    %17 = vector.shape_cast %16 : vector<28xf32> to vector<1x28xf32>
    %18 = arith.mulf %15, %15 : vector<14x28xf32>
    %cst_21 = arith.constant dense<0.000000e+00> : vector<28xf32>
    %19 = vector.multi_reduction <add>, %18, %cst_21 [0] : vector<14x28xf32> to vector<28xf32>
    %20 = vector.shape_cast %19 : vector<28xf32> to vector<1x28xf32>
    %c32_22 = arith.constant 32 : index
    %c0_23 = arith.constant 0 : index
    %21 = vector.load %arg3[%c32_22, %c0_23] : memref<70x128xf32, #tpu.memory_space<vmem>>, vector<1x4xf32>
    %c33 = arith.constant 33 : index
    %c0_24 = arith.constant 0 : index
    %22 = vector.load %arg3[%c33, %c0_24] : memref<70x128xf32, #tpu.memory_space<vmem>>, vector<1x4xf32>
    %c0_25 = arith.constant 0 : index
    %c0_26 = arith.constant 0 : index
    %23 = vector.load %arg10[%c0_25, %c0_26] : memref<2x128xf32, #tpu.memory_space<vmem>>, vector<1x28xf32>
    tpu.vector_store %arg10[%c0_25, %c0_26], %17 {strides = array<i32>} : memref<2x128xf32, #tpu.memory_space<vmem>>, vector<1x28xf32>,
    %c1_27 = arith.constant 1 : index
    %c0_28 = arith.constant 0 : index
    %24 = vector.load %arg10[%c1_27, %c0_28] : memref<2x128xf32, #tpu.memory_space<vmem>>, vector<1x28xf32>
    tpu.vector_store %arg10[%c1_27, %c0_28], %20 {strides = array<i32>} : memref<2x128xf32, #tpu.memory_space<vmem>>, vector<1x28xf32>,
    %c0_29 = arith.constant 0 : index
    %c0_30 = arith.constant 0 : index
    %25 = vector.load %arg3[%c0_29, %c0_30] : memref<70x128xf32, #tpu.memory_space<vmem>>, vector<28x4xf32>
    %c0_31 = arith.constant 0 : index
    %c0_32 = arith.constant 0 : index
    %26 = vector.load %arg10[%c0_31, %c0_32] : memref<2x128xf32, #tpu.memory_space<vmem>>, vector<2x28xf32>
    %cst_33 = arith.constant dense<0.000000e+00> : vector<2x4xf32>
    %27 = tpu.matmul %26, %25, %cst_33 {dimension_numbers = #tpu.dot_dimension_numbers<[1], [0], [0], [1], [0, 0, 1, 1], [], []>} : vector<2x28xf32>, vector<28x4xf32>, vector<2x4xf32> -> vector<2x4xf32>
    %cst_34 = arith.constant 0.0102040814 : f32
    %28 = vector.broadcast %cst_34 : f32 to vector<2x4xf32>
    %29 = arith.mulf %27, %28 : vector<2x4xf32>
    %30 = vector.extract_strided_slice %29 {offsets = [0, 0], sizes = [1, 4], strides = [1, 1]} : vector<2x4xf32> to vector<1x4xf32>
    %31 = vector.extract_strided_slice %29 {offsets = [1, 0], sizes = [1, 4], strides = [1, 1]} : vector<2x4xf32> to vector<1x4xf32>
    %32 = arith.mulf %30, %30 : vector<1x4xf32>
    %33 = arith.subf %31, %32 : vector<1x4xf32>
    %cst_35 = arith.constant 0.000000e+00 : f32
    %34 = vector.broadcast %cst_35 : f32 to vector<1x4xf32>
    %35 = arith.maximumf %33, %34 : vector<1x4xf32>
    %cst_36 = arith.constant 9.99999974E-6 : f32
    %36 = vector.broadcast %cst_36 : f32 to vector<1x4xf32>
    %37 = arith.addf %35, %36 : vector<1x4xf32>
    %38 = math.rsqrt %37 : vector<1x4xf32>
    %39 = arith.mulf %21, %38 : vector<1x4xf32>
    %40 = arith.mulf %30, %39 : vector<1x4xf32>
    %41 = arith.subf %22, %40 : vector<1x4xf32>
    %c0_37 = arith.constant 0 : index
    %c0_38 = arith.constant 0 : index
    %42 = vector.load %arg10[%c0_37, %c0_38] : memref<2x128xf32, #tpu.memory_space<vmem>>, vector<1x4xf32>
    tpu.vector_store %arg10[%c0_37, %c0_38], %39 {strides = array<i32>} : memref<2x128xf32, #tpu.memory_space<vmem>>, vector<1x4xf32>,
    %c1_39 = arith.constant 1 : index
    %c0_40 = arith.constant 0 : index
    %43 = vector.load %arg10[%c1_39, %c0_40] : memref<2x128xf32, #tpu.memory_space<vmem>>, vector<1x4xf32>
    tpu.vector_store %arg10[%c1_39, %c0_40], %41 {strides = array<i32>} : memref<2x128xf32, #tpu.memory_space<vmem>>, vector<1x4xf32>,
    %c28 = arith.constant 28 : index
    %c0_41 = arith.constant 0 : index
    %44 = vector.load %arg3[%c28, %c0_41] : memref<70x128xf32, #tpu.memory_space<vmem>>, vector<4x28xf32>
    %c0_42 = arith.constant 0 : index
    %c0_43 = arith.constant 0 : index
    %45 = vector.load %arg10[%c0_42, %c0_43] : memref<2x128xf32, #tpu.memory_space<vmem>>, vector<2x4xf32>
    %cst_44 = arith.constant dense<0.000000e+00> : vector<2x28xf32>
    %46 = tpu.matmul %45, %44, %cst_44 {dimension_numbers = #tpu.dot_dimension_numbers<[1], [0], [0], [1], [0, 0, 1, 1], [], []>} : vector<2x4xf32>, vector<4x28xf32>, vector<2x28xf32> -> vector<2x28xf32>
    %47 = vector.extract_strided_slice %46 {offsets = [0, 0], sizes = [1, 28], strides = [1, 1]} : vector<2x28xf32> to vector<1x28xf32>
    %48 = vector.extract_strided_slice %46 {offsets = [1, 0], sizes = [1, 28], strides = [1, 1]} : vector<2x28xf32> to vector<1x28xf32>
    %49 = vector.broadcast %47 : vector<1x28xf32> to vector<14x28xf32>
    %50 = arith.mulf %15, %49 : vector<14x28xf32>
    %51 = vector.broadcast %48 : vector<1x28xf32> to vector<14x28xf32>
    %52 = arith.addf %50, %51 : vector<14x28xf32>
    %cst_45 = arith.constant 0.000000e+00 : f32
    %53 = vector.broadcast %cst_45 : f32 to vector<14x28xf32>
    %54 = arith.cmpf oge, %52, %53 : vector<14x28xf32>
    %cst_46 = arith.constant 3.000000e-01 : f32
    %55 = vector.broadcast %cst_46 : f32 to vector<14x28xf32>
    %56 = arith.mulf %55, %52 : vector<14x28xf32>
    %57 = arith.select %54, %52, %56 : vector<14x28xi1>, vector<14x28xf32>
    %c0_47 = arith.constant 0 : index
    %c0_48 = arith.constant 0 : index
    %58 = vector.load %arg8[%c0_47, %c0_48] : memref<14x28xf32, #tpu.memory_space<vmem>>, vector<14x28xf32>
    tpu.vector_store %arg8[%c0_47, %c0_48], %57 {strides = array<i32>} : memref<14x28xf32, #tpu.memory_space<vmem>>, vector<14x28xf32>,
    %c0_49 = arith.constant 0 : index
    %c0_50 = arith.constant 0 : index
    %59 = tpu.strided_load %arg8[%c0_49, %c0_50] {strides = array<i32: 2, 1>} : memref<14x28xf32, #tpu.memory_space<vmem>>, vector<3x28xf32>
    %c0_51 = arith.constant 0 : index
    %c0_52 = arith.constant 0 : index
    %60 = vector.load %arg6[%c0_51, %c0_52] : memref<6x84xf32, #tpu.memory_space<vmem>>, vector<3x28xf32>
    tpu.vector_store %arg6[%c0_51, %c0_52], %59 {strides = array<i32>} : memref<6x84xf32, #tpu.memory_space<vmem>>, vector<3x28xf32>,
    %c1_53 = arith.constant 1 : index
    %c0_54 = arith.constant 0 : index
    %61 = tpu.strided_load %arg8[%c1_53, %c0_54] {strides = array<i32: 2, 1>} : memref<14x28xf32, #tpu.memory_space<vmem>>, vector<3x28xf32>
    %c0_55 = arith.constant 0 : index
    %c28_56 = arith.constant 28 : index
    %62 = vector.load %arg6[%c0_55, %c28_56] : memref<6x84xf32, #tpu.memory_space<vmem>>, vector<3x28xf32>
    tpu.vector_store %arg6[%c0_55, %c28_56], %61 {strides = array<i32>} : memref<6x84xf32, #tpu.memory_space<vmem>>, vector<3x28xf32>,
    %c2_57 = arith.constant 2 : index
    %c0_58 = arith.constant 0 : index
    %63 = tpu.strided_load %arg8[%c2_57, %c0_58] {strides = array<i32: 2, 1>} : memref<14x28xf32, #tpu.memory_space<vmem>>, vector<3x28xf32>
    %c0_59 = arith.constant 0 : index
    %c56 = arith.constant 56 : index
    %64 = vector.load %arg6[%c0_59, %c56] : memref<6x84xf32, #tpu.memory_space<vmem>>, vector<3x28xf32>
    tpu.vector_store %arg6[%c0_59, %c56], %63 {strides = array<i32>} : memref<6x84xf32, #tpu.memory_space<vmem>>, vector<3x28xf32>,
    %c7_60 = arith.constant 7 : index
    %c0_61 = arith.constant 0 : index
    %65 = tpu.strided_load %arg8[%c7_60, %c0_61] {strides = array<i32: 2, 1>} : memref<14x28xf32, #tpu.memory_space<vmem>>, vector<3x28xf32>
    %c3 = arith.constant 3 : index
    %c0_62 = arith.constant 0 : index
    %66 = vector.load %arg6[%c3, %c0_62] : memref<6x84xf32, #tpu.memory_space<vmem>>, vector<3x28xf32>
    tpu.vector_store %arg6[%c3, %c0_62], %65 {strides = array<i32>} : memref<6x84xf32, #tpu.memory_space<vmem>>, vector<3x28xf32>,
    %c8 = arith.constant 8 : index
    %c0_63 = arith.constant 0 : index
    %67 = tpu.strided_load %arg8[%c8, %c0_63] {strides = array<i32: 2, 1>} : memref<14x28xf32, #tpu.memory_space<vmem>>, vector<3x28xf32>
    %c3_64 = arith.constant 3 : index
    %c28_65 = arith.constant 28 : index
    %68 = vector.load %arg6[%c3_64, %c28_65] : memref<6x84xf32, #tpu.memory_space<vmem>>, vector<3x28xf32>
    tpu.vector_store %arg6[%c3_64, %c28_65], %67 {strides = array<i32>} : memref<6x84xf32, #tpu.memory_space<vmem>>, vector<3x28xf32>,
    %c9 = arith.constant 9 : index
    %c0_66 = arith.constant 0 : index
    %69 = tpu.strided_load %arg8[%c9, %c0_66] {strides = array<i32: 2, 1>} : memref<14x28xf32, #tpu.memory_space<vmem>>, vector<3x28xf32>
    %c3_67 = arith.constant 3 : index
    %c56_68 = arith.constant 56 : index
    %70 = vector.load %arg6[%c3_67, %c56_68] : memref<6x84xf32, #tpu.memory_space<vmem>>, vector<3x28xf32>
    tpu.vector_store %arg6[%c3_67, %c56_68], %69 {strides = array<i32>} : memref<6x84xf32, #tpu.memory_space<vmem>>, vector<3x28xf32>,
    %c48 = arith.constant 48 : index
    %c0_69 = arith.constant 0 : index
    %71 = vector.load %arg2[%c48, %c0_69] : memref<204x128xbf16, #tpu.memory_space<vmem>>, vector<84x24xbf16>
    %c0_70 = arith.constant 0 : index
    %c0_71 = arith.constant 0 : index
    %72 = vector.load %arg6[%c0_70, %c0_71] : memref<6x84xf32, #tpu.memory_space<vmem>>, vector<6x84xf32>
    %73 = arith.truncf %72 : vector<6x84xf32> to vector<6x84xbf16>
    %cst_72 = arith.constant dense<0.000000e+00> : vector<6x24xf32>
    %74 = tpu.matmul %73, %71, %cst_72 {dimension_numbers = #tpu.dot_dimension_numbers<[1], [0], [0], [1], [0, 0, 1, 1], [], []>} : vector<6x84xbf16>, vector<84x24xbf16>, vector<6x24xf32> -> vector<6x24xf32>
    %cst_73 = arith.constant dense<0.000000e+00> : vector<24xf32>
    %75 = vector.multi_reduction <add>, %74, %cst_73 [0] : vector<6x24xf32> to vector<24xf32>
    %76 = vector.shape_cast %75 : vector<24xf32> to vector<1x24xf32>
    %77 = arith.mulf %74, %74 : vector<6x24xf32>
    %cst_74 = arith.constant dense<0.000000e+00> : vector<24xf32>
    %78 = vector.multi_reduction <add>, %77, %cst_74 [0] : vector<6x24xf32> to vector<24xf32>
    %79 = vector.shape_cast %78 : vector<24xf32> to vector<1x24xf32>
    %c66 = arith.constant 66 : index
    %c0_75 = arith.constant 0 : index
    %80 = vector.load %arg3[%c66, %c0_75] : memref<70x128xf32, #tpu.memory_space<vmem>>, vector<1x8xf32>
    %c67 = arith.constant 67 : index
    %c0_76 = arith.constant 0 : index
    %81 = vector.load %arg3[%c67, %c0_76] : memref<70x128xf32, #tpu.memory_space<vmem>>, vector<1x8xf32>
    %c0_77 = arith.constant 0 : index
    %c0_78 = arith.constant 0 : index
    %82 = vector.load %arg10[%c0_77, %c0_78] : memref<2x128xf32, #tpu.memory_space<vmem>>, vector<1x24xf32>
    tpu.vector_store %arg10[%c0_77, %c0_78], %76 {strides = array<i32>} : memref<2x128xf32, #tpu.memory_space<vmem>>, vector<1x24xf32>,
    %c1_79 = arith.constant 1 : index
    %c0_80 = arith.constant 0 : index
    %83 = vector.load %arg10[%c1_79, %c0_80] : memref<2x128xf32, #tpu.memory_space<vmem>>, vector<1x24xf32>
    tpu.vector_store %arg10[%c1_79, %c0_80], %79 {strides = array<i32>} : memref<2x128xf32, #tpu.memory_space<vmem>>, vector<1x24xf32>,
    %c34 = arith.constant 34 : index
    %c0_81 = arith.constant 0 : index
    %84 = vector.load %arg3[%c34, %c0_81] : memref<70x128xf32, #tpu.memory_space<vmem>>, vector<24x8xf32>
    %c0_82 = arith.constant 0 : index
    %c0_83 = arith.constant 0 : index
    %85 = vector.load %arg10[%c0_82, %c0_83] : memref<2x128xf32, #tpu.memory_space<vmem>>, vector<2x24xf32>
    %cst_84 = arith.constant dense<0.000000e+00> : vector<2x8xf32>
    %86 = tpu.matmul %85, %84, %cst_84 {dimension_numbers = #tpu.dot_dimension_numbers<[1], [0], [0], [1], [0, 0, 1, 1], [], []>} : vector<2x24xf32>, vector<24x8xf32>, vector<2x8xf32> -> vector<2x8xf32>
    %cst_85 = arith.constant 0.055555556 : f32
    %87 = vector.broadcast %cst_85 : f32 to vector<2x8xf32>
    %88 = arith.mulf %86, %87 : vector<2x8xf32>
    %89 = vector.extract_strided_slice %88 {offsets = [0, 0], sizes = [1, 8], strides = [1, 1]} : vector<2x8xf32> to vector<1x8xf32>
    %90 = vector.extract_strided_slice %88 {offsets = [1, 0], sizes = [1, 8], strides = [1, 1]} : vector<2x8xf32> to vector<1x8xf32>
    %91 = arith.mulf %89, %89 : vector<1x8xf32>
    %92 = arith.subf %90, %91 : vector<1x8xf32>
    %cst_86 = arith.constant 0.000000e+00 : f32
    %93 = vector.broadcast %cst_86 : f32 to vector<1x8xf32>
    %94 = arith.maximumf %92, %93 : vector<1x8xf32>
    %cst_87 = arith.constant 9.99999974E-6 : f32
    %95 = vector.broadcast %cst_87 : f32 to vector<1x8xf32>
    %96 = arith.addf %94, %95 : vector<1x8xf32>
    %97 = math.rsqrt %96 : vector<1x8xf32>
    %98 = arith.mulf %80, %97 : vector<1x8xf32>
    %99 = arith.mulf %89, %98 : vector<1x8xf32>
    %100 = arith.subf %81, %99 : vector<1x8xf32>
    %c0_88 = arith.constant 0 : index
    %c0_89 = arith.constant 0 : index
    %101 = vector.load %arg10[%c0_88, %c0_89] : memref<2x128xf32, #tpu.memory_space<vmem>>, vector<1x8xf32>
    tpu.vector_store %arg10[%c0_88, %c0_89], %98 {strides = array<i32>} : memref<2x128xf32, #tpu.memory_space<vmem>>, vector<1x8xf32>,
    %c1_90 = arith.constant 1 : index
    %c0_91 = arith.constant 0 : index
    %102 = vector.load %arg10[%c1_90, %c0_91] : memref<2x128xf32, #tpu.memory_space<vmem>>, vector<1x8xf32>
    tpu.vector_store %arg10[%c1_90, %c0_91], %100 {strides = array<i32>} : memref<2x128xf32, #tpu.memory_space<vmem>>, vector<1x8xf32>,
    %c58 = arith.constant 58 : index
    %c0_92 = arith.constant 0 : index
    %103 = vector.load %arg3[%c58, %c0_92] : memref<70x128xf32, #tpu.memory_space<vmem>>, vector<8x24xf32>
    %c0_93 = arith.constant 0 : index
    %c0_94 = arith.constant 0 : index
    %104 = vector.load %arg10[%c0_93, %c0_94] : memref<2x128xf32, #tpu.memory_space<vmem>>, vector<2x8xf32>
    %cst_95 = arith.constant dense<0.000000e+00> : vector<2x24xf32>
    %105 = tpu.matmul %104, %103, %cst_95 {dimension_numbers = #tpu.dot_dimension_numbers<[1], [0], [0], [1], [0, 0, 1, 1], [], []>} : vector<2x8xf32>, vector<8x24xf32>, vector<2x24xf32> -> vector<2x24xf32>
    %106 = vector.extract_strided_slice %105 {offsets = [0, 0], sizes = [1, 24], strides = [1, 1]} : vector<2x24xf32> to vector<1x24xf32>
    %107 = vector.extract_strided_slice %105 {offsets = [1, 0], sizes = [1, 24], strides = [1, 1]} : vector<2x24xf32> to vector<1x24xf32>
    %108 = vector.broadcast %106 : vector<1x24xf32> to vector<6x24xf32>
    %109 = arith.mulf %74, %108 : vector<6x24xf32>
    %110 = vector.broadcast %107 : vector<1x24xf32> to vector<6x24xf32>
    %111 = arith.addf %109, %110 : vector<6x24xf32>
    %cst_96 = arith.constant 0.000000e+00 : f32
    %112 = vector.broadcast %cst_96 : f32 to vector<6x24xf32>
    %113 = arith.cmpf oge, %111, %112 : vector<6x24xf32>
    %cst_97 = arith.constant 3.000000e-01 : f32
    %114 = vector.broadcast %cst_97 : f32 to vector<6x24xf32>
    %115 = arith.mulf %114, %111 : vector<6x24xf32>
    %116 = arith.select %113, %111, %115 : vector<6x24xi1>, vector<6x24xf32>
    %c0_98 = arith.constant 0 : index
    %c0_99 = arith.constant 0 : index
    %117 = vector.load %arg9[%c0_98, %c0_99] : memref<6x24xf32, #tpu.memory_space<vmem>>, vector<6x24xf32>
    tpu.vector_store %arg9[%c0_98, %c0_99], %116 {strides = array<i32>} : memref<6x24xf32, #tpu.memory_space<vmem>>, vector<6x24xf32>,
    %c0_100 = arith.constant 0 : index
    %c0_101 = arith.constant 0 : index
    %118 = vector.load %arg9[%c0_100, %c0_101] : memref<6x24xf32, #tpu.memory_space<vmem>>, vector<1x24xf32>
    %c0_102 = arith.constant 0 : index
    %c0_103 = arith.constant 0 : index
    %119 = vector.load %arg7[%c0_102, %c0_103] : memref<2x72xf32, #tpu.memory_space<vmem>>, vector<1x24xf32>
    tpu.vector_store %arg7[%c0_102, %c0_103], %118 {strides = array<i32>} : memref<2x72xf32, #tpu.memory_space<vmem>>, vector<1x24xf32>,
    %c1_104 = arith.constant 1 : index
    %c0_105 = arith.constant 0 : index
    %120 = vector.load %arg9[%c1_104, %c0_105] : memref<6x24xf32, #tpu.memory_space<vmem>>, vector<1x24xf32>
    %c0_106 = arith.constant 0 : index
    %c24 = arith.constant 24 : index
    %121 = vector.load %arg7[%c0_106, %c24] : memref<2x72xf32, #tpu.memory_space<vmem>>, vector<1x24xf32>
    tpu.vector_store %arg7[%c0_106, %c24], %120 {strides = array<i32>} : memref<2x72xf32, #tpu.memory_space<vmem>>, vector<1x24xf32>,
    %c2_107 = arith.constant 2 : index
    %c0_108 = arith.constant 0 : index
    %122 = vector.load %arg9[%c2_107, %c0_108] : memref<6x24xf32, #tpu.memory_space<vmem>>, vector<1x24xf32>
    %c0_109 = arith.constant 0 : index
    %c48_110 = arith.constant 48 : index
    %123 = vector.load %arg7[%c0_109, %c48_110] : memref<2x72xf32, #tpu.memory_space<vmem>>, vector<1x24xf32>
    tpu.vector_store %arg7[%c0_109, %c48_110], %122 {strides = array<i32>} : memref<2x72xf32, #tpu.memory_space<vmem>>, vector<1x24xf32>,
    %c3_111 = arith.constant 3 : index
    %c0_112 = arith.constant 0 : index
    %124 = vector.load %arg9[%c3_111, %c0_112] : memref<6x24xf32, #tpu.memory_space<vmem>>, vector<1x24xf32>
    %c1_113 = arith.constant 1 : index
    %c0_114 = arith.constant 0 : index
    %125 = vector.load %arg7[%c1_113, %c0_114] : memref<2x72xf32, #tpu.memory_space<vmem>>, vector<1x24xf32>
    tpu.vector_store %arg7[%c1_113, %c0_114], %124 {strides = array<i32>} : memref<2x72xf32, #tpu.memory_space<vmem>>, vector<1x24xf32>,
    %c4 = arith.constant 4 : index
    %c0_115 = arith.constant 0 : index
    %126 = vector.load %arg9[%c4, %c0_115] : memref<6x24xf32, #tpu.memory_space<vmem>>, vector<1x24xf32>
    %c1_116 = arith.constant 1 : index
    %c24_117 = arith.constant 24 : index
    %127 = vector.load %arg7[%c1_116, %c24_117] : memref<2x72xf32, #tpu.memory_space<vmem>>, vector<1x24xf32>
    tpu.vector_store %arg7[%c1_116, %c24_117], %126 {strides = array<i32>} : memref<2x72xf32, #tpu.memory_space<vmem>>, vector<1x24xf32>,
    %c5 = arith.constant 5 : index
    %c0_118 = arith.constant 0 : index
    %128 = vector.load %arg9[%c5, %c0_118] : memref<6x24xf32, #tpu.memory_space<vmem>>, vector<1x24xf32>
    %c1_119 = arith.constant 1 : index
    %c48_120 = arith.constant 48 : index
    %129 = vector.load %arg7[%c1_119, %c48_120] : memref<2x72xf32, #tpu.memory_space<vmem>>, vector<1x24xf32>
    tpu.vector_store %arg7[%c1_119, %c48_120], %128 {strides = array<i32>} : memref<2x72xf32, #tpu.memory_space<vmem>>, vector<1x24xf32>,
    %c132 = arith.constant 132 : index
    %c0_121 = arith.constant 0 : index
    %130 = vector.load %arg2[%c132, %c0_121] : memref<204x128xbf16, #tpu.memory_space<vmem>>, vector<72x128xbf16>
    %c0_122 = arith.constant 0 : index
    %c0_123 = arith.constant 0 : index
    %131 = vector.load %arg7[%c0_122, %c0_123] : memref<2x72xf32, #tpu.memory_space<vmem>>, vector<2x72xf32>
    %132 = arith.truncf %131 : vector<2x72xf32> to vector<2x72xbf16>
    %cst_124 = arith.constant dense<0.000000e+00> : vector<2x128xf32>
    %133 = tpu.matmul %132, %130, %cst_124 {dimension_numbers = #tpu.dot_dimension_numbers<[1], [0], [0], [1], [0, 0, 1, 1], [], []>} : vector<2x72xbf16>, vector<72x128xbf16>, vector<2x128xf32> -> vector<2x128xf32>
    %cst_125 = arith.constant dense<0.000000e+00> : vector<128xf32>
    %134 = vector.multi_reduction <add>, %133, %cst_125 [0] : vector<2x128xf32> to vector<128xf32>
    %135 = vector.shape_cast %134 : vector<128xf32> to vector<1x128xf32>
    %136 = arith.mulf %133, %133 : vector<2x128xf32>
    %cst_126 = arith.constant dense<0.000000e+00> : vector<128xf32>
    %137 = vector.multi_reduction <add>, %136, %cst_126 [0] : vector<2x128xf32> to vector<128xf32>
    %138 = vector.shape_cast %137 : vector<128xf32> to vector<1x128xf32>
    %c68 = arith.constant 68 : index
    %c0_127 = arith.constant 0 : index
    %139 = vector.load %arg3[%c68, %c0_127] : memref<70x128xf32, #tpu.memory_space<vmem>>, vector<1x128xf32>
    %c69 = arith.constant 69 : index
    %c0_128 = arith.constant 0 : index
    %140 = vector.load %arg3[%c69, %c0_128] : memref<70x128xf32, #tpu.memory_space<vmem>>, vector<1x128xf32>
    %cst_129 = arith.constant 5.000000e-01 : f32
    %141 = vector.broadcast %cst_129 : f32 to vector<1x128xf32>
    %142 = arith.mulf %135, %141 : vector<1x128xf32>
    %cst_130 = arith.constant 5.000000e-01 : f32
    %143 = vector.broadcast %cst_130 : f32 to vector<1x128xf32>
    %144 = arith.mulf %138, %143 : vector<1x128xf32>
    %145 = arith.mulf %142, %142 : vector<1x128xf32>
    %146 = arith.subf %144, %145 : vector<1x128xf32>
    %cst_131 = arith.constant 0.000000e+00 : f32
    %147 = vector.broadcast %cst_131 : f32 to vector<1x128xf32>
    %148 = arith.maximumf %146, %147 : vector<1x128xf32>
    %cst_132 = arith.constant 9.99999974E-6 : f32
    %149 = vector.broadcast %cst_132 : f32 to vector<1x128xf32>
    %150 = arith.addf %148, %149 : vector<1x128xf32>
    %151 = math.rsqrt %150 : vector<1x128xf32>
    %152 = arith.mulf %139, %151 : vector<1x128xf32>
    %153 = arith.mulf %142, %152 : vector<1x128xf32>
    %154 = arith.subf %140, %153 : vector<1x128xf32>
    %155 = vector.broadcast %152 : vector<1x128xf32> to vector<2x128xf32>
    %156 = arith.mulf %133, %155 : vector<2x128xf32>
    %157 = vector.broadcast %154 : vector<1x128xf32> to vector<2x128xf32>
    %158 = arith.addf %156, %157 : vector<2x128xf32>
    %cst_133 = arith.constant 0.000000e+00 : f32
    %159 = vector.broadcast %cst_133 : f32 to vector<2x128xf32>
    %160 = arith.cmpf oge, %158, %159 : vector<2x128xf32>
    %cst_134 = arith.constant 3.000000e-01 : f32
    %161 = vector.broadcast %cst_134 : f32 to vector<2x128xf32>
    %162 = arith.mulf %161, %158 : vector<2x128xf32>
    %163 = arith.select %160, %158, %162 : vector<2x128xi1>, vector<2x128xf32>
    %c0_135 = arith.constant 0 : index
    %c0_136 = arith.constant 0 : index
    %164 = vector.load %arg4[%c0_135, %c0_136] : memref<2x128xf32, #tpu.memory_space<vmem>>, vector<2x128xf32>
    tpu.vector_store %arg4[%c0_135, %c0_136], %163 {strides = array<i32>} : memref<2x128xf32, #tpu.memory_space<vmem>>, vector<2x128xf32>,
    return
  }
  func.func @transform_0(%arg0: i32) -> (i32, i32) {
    %c0_i32 = arith.constant 0 : i32
    %c0_i32_0 = arith.constant 0 : i32
    %c0_i32_1 = arith.constant 0 : i32
    return %c0_i32, %c0_i32_0 : i32, i32
  }
  func.func @transform_1(%arg0: i32) -> (i32, i32) {
    %c0_i32 = arith.constant 0 : i32
    %c0_i32_0 = arith.constant 0 : i32
    %c0_i32_1 = arith.constant 0 : i32
    return %c0_i32, %c0_i32_0 : i32, i32
  }
  func.func @transform_2(%arg0: i32) -> (i32, i32) {
    %c0_i32 = arith.constant 0 : i32
    %c0_i32_0 = arith.constant 0 : i32
    %c0_i32_1 = arith.constant 0 : i32
    return %c0_i32, %c0_i32_0 : i32, i32
  }
  func.func @transform_3(%arg0: i32) -> (i32, i32) {
    %c0_i32 = arith.constant 0 : i32
    %c0_i32_0 = arith.constant 0 : i32
    %c0_i32_1 = arith.constant 0 : i32
    return %c0_i32, %c0_i32_0 : i32, i32
  }
}

</mosaic_0001>

<llo_original>
// kernel: encoder_small_cnn.1
$region0: #{encoder_small_cnn.1}
  #allocation0 [shape = 'u32[]', space=smem, size = 0x4, offset = 0x4, fixed_abs, tag = 'smem constant byte address 0x4 - core index']
  #allocation1 [shape = 'u32[144,128]{1,0:T(1,128)}', space=vmem, size = 0x12000, scoped, tag = 'internal scratch']
  #allocation2 [shape = 'f32[14,48]{1,0:T(8,128)}', space=vmem, size = 0x2000, scoped, tag = 'scratch operand']
  #allocation3 [shape = 'f32[6,84]{1,0:T(8,128)}', space=vmem, size = 0x1000, scoped, tag = 'scratch operand']
  #allocation4 [shape = 'f32[2,72]{1,0:T(2,128)}', space=vmem, size = 0x400, scoped, tag = 'scratch operand']
  #allocation5 [shape = 'f32[14,28]{1,0:T(8,128)}', space=vmem, size = 0x2000, scoped, tag = 'scratch operand']
  #allocation6 [shape = 'f32[6,24]{1,0:T(8,128)}', space=vmem, size = 0x1000, scoped, tag = 'scratch operand']
  #allocation7 [shape = 'f32[2,128]{1,0:T(2,128)}', space=vmem, size = 0x400, scoped, tag = 'scratch operand']
  %s0 = inlined_call_operand.vmem [shape: f32[32,16], index: 0, kind: input, shape index: {}]
  %s1 = inlined_call_operand.vmem [shape: bf16[204,128], index: 1, kind: input, shape index: {}]
  %s2 = inlined_call_operand.vmem [shape: f32[70,128], index: 2, kind: input, shape index: {}]
  %s3 = inlined_call_operand.hbm [shape: f32[2,128], index: 3, kind: output, shape index: {}]
  %s4 = sld [smem:[#allocation0]]
  $region22: #{encoder_small_cnn.1} parent=0
    _
  %s6 = ssub.s32 1, %s4
  %s7 = scalar_select 0, %s6, %s4
  $region1: #{encoder_small_cnn.1} parent=0
    #allocation8 [shape = 'u8[1024]{0}', space=vmem, size = 0x400, scoped, tag = 'output window, operand 0, single buffered']
    #allocation9 [shape = 's32[1]{0}', space=sflag, size = 0x4, scoped, tag = 'scoped memory for encoder_small_cnn.1']
    %8 = vsyncpa [#allocation9], 0
    // Predicated region
    $region2: #{encoder_small_cnn.1} parent=1 // pred_check
      _
    $region3: #{encoder_small_cnn.1} parent=1 // pred_check_branch
      %10 = sbr.rel (0) target = $region5
    $region4: #{encoder_small_cnn.1} parent=1 // pred_region
      _
    $region5: #{encoder_small_cnn.1} parent=1 // pred_fallthru
      _
    // Predicated region
    $region6: #{encoder_small_cnn.1} parent=1 // pred_check
      _
    $region7: #{encoder_small_cnn.1} parent=1 // pred_check_branch
      %12 = sbr.rel (0) target = $region9
    $region8: #{encoder_small_cnn.1} parent=1 // pred_region
      _
    $region9: #{encoder_small_cnn.1} parent=1 // pred_fallthru
      _
    // Predicated region
    $region10: #{encoder_small_cnn.1} parent=1 // pred_check
      _
    $region11: #{encoder_small_cnn.1} parent=1 // pred_check_branch
      %14 = sbr.rel (0) target = $region13
    $region12: #{encoder_small_cnn.1} parent=1 // pred_region
      _
    $region13: #{encoder_small_cnn.1} parent=1 // pred_fallthru
      _
    %v16 = vld [vmem:[%s0] ss:$2 sm:$0x7f]
    %vm17 = vcmask 129024
    %18 = vst.msk [vmem:[#allocation2] sm:$0x7f] %vm17, %v16
    %s19 = scalar_lea.vmem %s0, 1
    %v20 = vld [vmem:[%s19] ss:$2 sm:$0x7f]
    %22 = vrot.lane.b32.xlu0 %v20, 16
    %v23 = vpop.permute.xlu0 %22
    %vm25 = vcmask 260224
    %26 = vst.msk [vmem:[#allocation2] sm:$0x7f] %vm25, %v23
    %s27 = scalar_lea.vmem %s0, 2
    %v28 = vld [vmem:[%s27] ss:$2 sm:$0x7f]
    %30 = vrot.lane.b32.xlu0 %v28, 32
    %v31 = vpop.permute.xlu0 %30
    %vm33 = vcmask 391424
    %34 = vst.msk [vmem:[#allocation2] sm:$0x7f] %vm33, %v31
    %s35 = scalar_lea.vmem %s0, 16
    %v36 = vld [vmem:[%s35] ss:$2 sm:$0x7f]
    %37 = vst.msk [vmem:[#allocation2 + $0x7] sm:$0x7f] %vm17, %v36
    %s38 = scalar_lea.vmem %s0, 17
    %v39 = vld [vmem:[%s38] ss:$2 sm:$0x7f]
    %41 = vrot.lane.b32.xlu0 %v39, 16
    %v42 = vpop.permute.xlu0 %41
    %44 = vst.msk [vmem:[#allocation2 + $0x7] sm:$0x7f] %vm25, %v42
    %s45 = scalar_lea.vmem %s0, 18
    %v46 = vld [vmem:[%s45] ss:$2 sm:$0x7f]
    %48 = vrot.lane.b32.xlu0 %v46, 32
    %v49 = vpop.permute.xlu0 %48
    %51 = vst.msk [vmem:[#allocation2 + $0x7] sm:$0x7f] %vm33, %v49
    %v52 = vld [vmem:[%s1] sm:$0xf]
    %v53 = vld [vmem:[%s1 + $0x4] sm:$0xf]
    %v54 = vld [vmem:[%s1 + $0x8] sm:$0xf]
    %v55 = vld [vmem:[%s1 + $0xc] sm:$0xf]
    %v56 = vld [vmem:[%s1 + $0x10] sm:$0xf]
    %v57 = vld [vmem:[%s1 + $0x14] sm:$0xf]
    %v58 = vld [vmem:[#allocation2] sm:$0xff]
    %v59 = vld [vmem:[#allocation2 + $0x8] sm:$0x3f]
    %v60 = vpack.c.bf16 %v59, %v58
    %v67 = vunpack.c.l.b16 %v52
    %v68 = vunpack.c.l.b16 %v53
    %v69 = vunpack.c.l.b16 %v54
    %v70 = vunpack.c.l.b16 %v55
    %v71 = vunpack.c.l.b16 %v56
    %v72 = vunpack.c.l.b16 %v57
    %v73 = vpack.c.b16 %v68, %v67
    %v74 = vpack.c.b16 %v70, %v69
    %v75 = vpack.c.b16 %v72, %v71
    %vm79 = vcmask 392192
    %v81 = vsel %vm79, %v60, 0
    %83 = vmatprep.subr.bf16.mxu0 0
    %84 = vmatpush1.bf16.msra.mxu0 0
    %85 = vmatprep.subr.bf16.mxu0 0
    %86 = vmatpush1.bf16.msra.mxu0 0
    %87 = vmatprep.subr.bf16.mxu0 0
    %88 = vmatpush1.bf16.msra.mxu0 0
    %89 = vmatprep.subr.bf16.mxu0 0
    %90 = vmatpush1.bf16.msra.mxu0 0
    %91 = vmatprep.subr.bf16.mxu0 0
    %92 = vmatpush1.bf16.msra.mxu0 0
    %93 = vmatprep.subr.bf16.mxu0 0
    %94 = vmatpush1.bf16.msra.mxu0 %v75
    %95 = vmatprep.subr.bf16.mxu0 0
    %96 = vmatpush1.bf16.msra.mxu0 %v74
    %97 = vmatprep.subr.bf16.mxu0 0
    %98 = vmatpush1.bf16.msra.mxu0 %v73
    %99 = vmatprep.subr.bf16.mxu0 0
    %100 = vmatpush2.bf16.msra.mxu0 0
    %101 = vmatprep.subr.bf16.mxu0 0
    %102 = vmatpush2.bf16.msra.mxu0 0
    %103 = vmatprep.subr.bf16.mxu0 0
    %104 = vmatpush2.bf16.msra.mxu0 0
    %105 = vmatprep.subr.bf16.mxu0 0
    %106 = vmatpush2.bf16.msra.mxu0 0
    %107 = vmatprep.subr.bf16.mxu0 0
    %108 = vmatpush2.bf16.msra.mxu0 0
    %109 = vmatprep.subr.bf16.mxu0 0
    %110 = vmatpush2.bf16.msra.mxu0 0
    %111 = vmatprep.subr.bf16.mxu0 0
    %112 = vmatpush2.bf16.msra.mxu0 0
    %113 = vmatprep.subr.bf16.mxu0 0
    %114 = vmatpush2.bf16.msra.mxu0 0
    %115 = vmatprep.mubr.bf16.mxu0 0
    %116 = vmatmul.mubr.bf16.gmra.mxu0 %v81
    %v117 = vpop.f32.mrf.mxu0
    %v118 = vadd.f32 0.0, %v117
    %v119 = vpop.f32.mrf.mxu0
    %v120 = vpop.f32.mrf.mxu0
    %v121 = vadd.f32 0.0, %v120
    %v122 = vpop.f32.mrf.mxu0
    %123 = vdwg.mxu0
    %vm124 = vcmask 228352
    %v125 = vsel %vm124, %v118, 0.0
    %vm126 = vcmask 226304
    %v127 = vsel %vm126, %v121, 0.0
    %v128 = vadd.f32 %v125, %v127
    %v129 = vrot.slane %v128, 4
    %v130 = vadd.f32 %v128, %v129
    %v131 = vrot.slane %v130, 2
    %v132 = vadd.f32 %v130, %v131
    %v133 = vrot.slane %v132, 1
    %v134 = vadd.f32 %v132, %v133
    %v135 = vmul.f32 %v118, %v118
    %v136 = vmul.f32 %v121, %v121
    %v137 = vsel %vm124, %v135, 0.0
    %v138 = vsel %vm126, %v136, 0.0
    %v139 = vadd.f32 %v137, %v138
    %v140 = vrot.slane %v139, 4
    %v141 = vadd.f32 %v139, %v140
    %v142 = vrot.slane %v141, 2
    %v143 = vadd.f32 %v141, %v142
    %v144 = vrot.slane %v143, 1
    %v145 = vadd.f32 %v143, %v144
    %v146 = vld [vmem:[%s2 + $0x20] sm:$0x1]
    %v147 = vld [vmem:[%s2 + $0x21] sm:$0x1]
    %vm148 = vcmask 221184
    %149 = vst.msk [vmem:[#allocation7] sm:$0x1] %vm148, %v134
    %150 = vst.msk [vmem:[#allocation7 + $0x1] sm:$0x1] %vm148, %v145
    %v151 = vld [vmem:[%s2] sm:$0xff]
    %v152 = vld [vmem:[%s2 + $0x8] sm:$0xff]
    %v153 = vld [vmem:[%s2 + $0x10] sm:$0xff]
    %v154 = vld [vmem:[%s2 + $0x18] sm:$0xf]
    %v155 = vld [vmem:[#allocation7] sm:$0x3]
    %v157 = vsel %vm124, %v155, 0
    %vm159 = vcmask 1043456
    %v161 = vsel %vm159, %v154, 0
    %163 = vmatprep.subr.mxu0 0.0
    %164 = vmatpush1.msra.mxu0 0.0
    %165 = vmatprep.subr.mxu0 0.0
    %166 = vmatpush1.msra.mxu0 0.0
    %167 = vmatprep.subr.mxu0 0.0
    %168 = vmatpush1.msra.mxu0 0.0
    %169 = vmatprep.subr.mxu0 0.0
    %170 = vmatpush1.msra.mxu0 0.0
    %171 = vmatprep.subr.mxu0 0.0
    %172 = vmatpush1.msra.mxu0 0.0
    %173 = vmatprep.subr.mxu0 0.0
    %174 = vmatpush1.msra.mxu0 0.0
    %175 = vmatprep.subr.mxu0 0.0
    %176 = vmatpush1.msra.mxu0 0.0
    %177 = vmatprep.subr.mxu0 0.0
    %178 = vmatpush1.msra.mxu0 0.0
    %179 = vmatprep.subr.mxu0 0.0
    %180 = vmatpush1.msra.mxu0 0.0
    %181 = vmatprep.subr.mxu0 0.0
    %182 = vmatpush1.msra.mxu0 0.0
    %183 = vmatprep.subr.mxu0 0.0
    %184 = vmatpush1.msra.mxu0 0.0
    %185 = vmatprep.subr.mxu0 0.0
    %186 = vmatpush1.msra.mxu0 0.0
    %187 = vmatprep.subr.mxu0 0.0
    %188 = vmatpush1.msra.mxu0 %v161
    %189 = vmatprep.subr.mxu0 0.0
    %190 = vmatpush1.msra.mxu0 %v153
    %191 = vmatprep.subr.mxu0 0.0
    %192 = vmatpush1.msra.mxu0 %v152
    %193 = vmatprep.subr.mxu0 0.0
    %194 = vmatpush1.msra.mxu0 %v151
    %195 = vmatprep.subr.mxu0 0.0
    %196 = vmatpush2.msra.mxu0 0.0
    %197 = vmatprep.subr.mxu0 0.0
    %198 = vmatpush2.msra.mxu0 0.0
    %199 = vmatprep.subr.mxu0 0.0
    %200 = vmatpush2.msra.mxu0 0.0
    %201 = vmatprep.subr.mxu0 0.0
    %202 = vmatpush2.msra.mxu0 0.0
    %203 = vmatprep.subr.mxu0 0.0
    %204 = vmatpush2.msra.mxu0 0.0
    %205 = vmatprep.subr.mxu0 0.0
    %206 = vmatpush2.msra.mxu0 0.0
    %207 = vmatprep.subr.mxu0 0.0
    %208 = vmatpush2.msra.mxu0 0.0
    %209 = vmatprep.subr.mxu0 0.0
    %210 = vmatpush2.msra.mxu0 0.0
    %211 = vmatprep.subr.mxu0 0.0
    %212 = vmatpush2.msra.mxu0 0.0
    %213 = vmatprep.subr.mxu0 0.0
    %214 = vmatpush2.msra.mxu0 0.0
    %215 = vmatprep.subr.mxu0 0.0
    %216 = vmatpush2.msra.mxu0 0.0
    %217 = vmatprep.subr.mxu0 0.0
    %218 = vmatpush2.msra.mxu0 0.0
    %219 = vmatprep.subr.mxu0 0.0
    %220 = vmatpush2.msra.mxu0 0.0
    %221 = vmatprep.subr.mxu0 0.0
    %222 = vmatpush2.msra.mxu0 0.0
    %223 = vmatprep.subr.mxu0 0.0
    %224 = vmatpush2.msra.mxu0 0.0
    %225 = vmatprep.subr.mxu0 0.0
    %226 = vmatpush2.msra.mxu0 0.0
    %227 = vmatprep.mubr.f32.mxu0 0.0
    %228 = vmatmul.mubr.f32.gmra.mxu0 %v157
    %v229 = vpop.f32.mrf.mxu0
    %v230 = vadd.f32 0.0, %v229
    %v231 = vpop.f32.mrf.mxu0
    %232 = vdwg.mxu0
    %v233 = vmul.f32 %v230, 0.010204081
    %v234 = vmul.f32 %v233, %v233
    %v236 = vrot.slane %v234, 7
    %v238 = vsub.f32 %v233, %v236
    %v239 = vmax.f32 %v238, 0.0
    %v240 = vadd.f32 %v239, 1e-05
    %v241 = vrsqrt.pop %v240
    %v243 = vrot.slane %v241, 1
    %v245 = vmul.f32 %v146, %v243
    %v246 = vmul.f32 %v233, %v245
    %v247 = vsub.f32 %v147, %v246
    %vm248 = vcmask 24576
    %249 = vst.msk [vmem:[#allocation7] sm:$0x1] %vm248, %v245
    %250 = vst.msk [vmem:[#allocation7 + $0x1] sm:$0x1] %vm248, %v247
    %v251 = vld [vmem:[%s2 + $0x1c] sm:$0xf]
    %v252 = vld [vmem:[#allocation7] sm:$0x3]
    %vm253 = vcmask 31744
    %v255 = vsel %vm253, %v252, 0
    %v258 = vsel %vm159, %v251, 0
    %260 = vmatprep.subr.mxu0 0.0
    %261 = vmatpush1.msra.mxu0 0.0
    %262 = vmatprep.subr.mxu0 0.0
    %263 = vmatpush1.msra.mxu0 0.0
    %264 = vmatprep.subr.mxu0 0.0
    %265 = vmatpush1.msra.mxu0 0.0
    %266 = vmatprep.subr.mxu0 0.0
    %267 = vmatpush1.msra.mxu0 0.0
    %268 = vmatprep.subr.mxu0 0.0
    %269 = vmatpush1.msra.mxu0 0.0
    %270 = vmatprep.subr.mxu0 0.0
    %271 = vmatpush1.msra.mxu0 0.0
    %272 = vmatprep.subr.mxu0 0.0
    %273 = vmatpush1.msra.mxu0 0.0
    %274 = vmatprep.subr.mxu0 0.0
    %275 = vmatpush1.msra.mxu0 0.0
    %276 = vmatprep.subr.mxu0 0.0
    %277 = vmatpush1.msra.mxu0 0.0
    %278 = vmatprep.subr.mxu0 0.0
    %279 = vmatpush1.msra.mxu0 0.0
    %280 = vmatprep.subr.mxu0 0.0
    %281 = vmatpush1.msra.mxu0 0.0
    %282 = vmatprep.subr.mxu0 0.0
    %283 = vmatpush1.msra.mxu0 0.0
    %284 = vmatprep.subr.mxu0 0.0
    %285 = vmatpush1.msra.mxu0 0.0
    %286 = vmatprep.subr.mxu0 0.0
    %287 = vmatpush1.msra.mxu0 0.0
    %288 = vmatprep.subr.mxu0 0.0
    %289 = vmatpush1.msra.mxu0 0.0
    %290 = vmatprep.subr.mxu0 0.0
    %291 = vmatpush1.msra.mxu0 %v258
    %292 = vmatprep.subr.mxu0 0.0
    %293 = vmatpush2.msra.mxu0 0.0
    %294 = vmatprep.subr.mxu0 0.0
    %295 = vmatpush2.msra.mxu0 0.0
    %296 = vmatprep.subr.mxu0 0.0
    %297 = vmatpush2.msra.mxu0 0.0
    %298 = vmatprep.subr.mxu0 0.0
    %299 = vmatpush2.msra.mxu0 0.0
    %300 = vmatprep.subr.mxu0 0.0
    %301 = vmatpush2.msra.mxu0 0.0
    %302 = vmatprep.subr.mxu0 0.0
    %303 = vmatpush2.msra.mxu0 0.0
    %304 = vmatprep.subr.mxu0 0.0
    %305 = vmatpush2.msra.mxu0 0.0
    %306 = vmatprep.subr.mxu0 0.0
    %307 = vmatpush2.msra.mxu0 0.0
    %308 = vmatprep.subr.mxu0 0.0
    %309 = vmatpush2.msra.mxu0 0.0
    %310 = vmatprep.subr.mxu0 0.0
    %311 = vmatpush2.msra.mxu0 0.0
    %312 = vmatprep.subr.mxu0 0.0
    %313 = vmatpush2.msra.mxu0 0.0
    %314 = vmatprep.subr.mxu0 0.0
    %315 = vmatpush2.msra.mxu0 0.0
    %316 = vmatprep.subr.mxu0 0.0
    %317 = vmatpush2.msra.mxu0 0.0
    %318 = vmatprep.subr.mxu0 0.0
    %319 = vmatpush2.msra.mxu0 0.0
    %320 = vmatprep.subr.mxu0 0.0
    %321 = vmatpush2.msra.mxu0 0.0
    %322 = vmatprep.subr.mxu0 0.0
    %323 = vmatpush2.msra.mxu0 0.0
    %324 = vmatprep.mubr.f32.mxu0 0.0
    %325 = vmatmul.mubr.f32.gmra.mxu0 %v255
    %v326 = vpop.f32.mrf.mxu0
    %v327 = vadd.f32 0.0, %v326
    %v328 = vpop.f32.mrf.mxu0
    %329 = vdwg.mxu0
    %v330 = vlaneseq
    %v331 = vshrl.u32 %v330, 7
    %v332 = vsub.s32 0, %v331
    %v333 = vrot.slane %v327, %v332
    %v334 = vmul.f32 %v118, %v333
    %v335 = vmul.f32 %v121, %v333
    %v336 = vlaneseq
    %v337 = vshrl.u32 %v336, 7
    %v338 = vsub.s32 1, %v337
    %v339 = vrot.slane %v327, %v338
    %v340 = vadd.f32 %v334, %v339
    %v341 = vadd.f32 %v335, %v339
    %vm342 = vcmp.ge.f32.partialorder %v340, 0.0
    %vm343 = vcmp.ge.f32.partialorder %v341, 0.0
    %v344 = vmul.f32 %v340, 0.3
    %v345 = vmul.f32 %v341, 0.3
    %v346 = vsel %vm342, %v340, %v344
    %v347 = vsel %vm343, %v341, %v345
    %348 = vst.msk [vmem:[#allocation5] sm:$0xff] %vm124, %v346
    %349 = vst.msk [vmem:[#allocation5 + $0x8] sm:$0x3f] %vm126, %v347
    %v350 = vld [vmem:[#allocation5] ss:$2 sm:$0x7]
    %vm351 = vcmask 223232
    %352 = vst.msk [vmem:[#allocation3] sm:$0x7] %vm351, %v350
    %s353 = scalar_lea.vmem [#allocation5], 1
    %v354 = vld [vmem:[%s353] ss:$2 sm:$0x7]
    %356 = vrot.lane.b32.xlu0 %v354, 28
    %v357 = vpop.permute.xlu0 %356
    %vm359 = vcmask 452832
    %360 = vst.msk [vmem:[#allocation3] sm:$0x7] %vm359, %v357
    %s361 = scalar_lea.vmem [#allocation5], 2
    %v362 = vld [vmem:[%s361] ss:$2 sm:$0x7]
    %364 = vrot.lane.b32.xlu0 %v362, 56
    %v365 = vpop.permute.xlu0 %364
    %vm367 = vcmask 682432
    %368 = vst.msk [vmem:[#allocation3] sm:$0x7] %vm367, %v365
    %s369 = scalar_lea.vmem [#allocation5], 7
    %v370 = vld [vmem:[%s369] ss:$2 sm:$0x7]
    %371 = vst.msk [vmem:[#allocation3 + $0x3] sm:$0x7] %vm351, %v370
    %s372 = scalar_lea.vmem [#allocation5], 8
    %v373 = vld [vmem:[%s372] ss:$2 sm:$0x7]
    %375 = vrot.lane.b32.xlu0 %v373, 28
    %v376 = vpop.permute.xlu0 %375
    %378 = vst.msk [vmem:[#allocation3 + $0x3] sm:$0x7] %vm359, %v376
    %s379 = scalar_lea.vmem [#allocation5], 9
    %v380 = vld [vmem:[%s379] ss:$2 sm:$0x7]
    %382 = vrot.lane.b32.xlu0 %v380, 56
    %v383 = vpop.permute.xlu0 %382
    %385 = vst.msk [vmem:[#allocation3 + $0x3] sm:$0x7] %vm367, %v383
    %v386 = vld [vmem:[%s1 + $0x18] sm:$0xf]
    %v387 = vld [vmem:[%s1 + $0x1c] sm:$0xf]
    %v388 = vld [vmem:[%s1 + $0x20] sm:$0xf]
    %v389 = vld [vmem:[%s1 + $0x24] sm:$0xf]
    %v390 = vld [vmem:[%s1 + $0x28] sm:$0xf]
    %v391 = vld [vmem:[%s1 + $0x2c] sm:$0xf]
    %v392 = vld [vmem:[%s1 + $0x30] sm:$0xf]
    %v393 = vld [vmem:[%s1 + $0x34] sm:$0xf]
    %v394 = vld [vmem:[%s1 + $0x38] sm:$0xf]
    %v395 = vld [vmem:[%s1 + $0x3c] sm:$0xf]
    %v396 = vld [vmem:[%s1 + $0x40] sm:$0x3]
    %v397 = vld [vmem:[#allocation3] sm:$0x3f]
    %v398 = vpack.c.bf16 %v397, %v397
    %v410 = vunpack.c.l.b16 %v386
    %v411 = vunpack.c.l.b16 %v387
    %v412 = vunpack.c.l.b16 %v388
    %v413 = vunpack.c.l.b16 %v389
    %v414 = vunpack.c.l.b16 %v390
    %v415 = vunpack.c.l.b16 %v391
    %v416 = vunpack.c.l.b16 %v392
    %v417 = vunpack.c.l.b16 %v393
    %v418 = vunpack.c.l.b16 %v394
    %v419 = vunpack.c.l.b16 %v395
    %v420 = vunpack.c.l.b16 %v396
    %v421 = vpack.c.b16 %v411, %v410
    %v422 = vpack.c.b16 %v413, %v412
    %v423 = vpack.c.b16 %v415, %v414
    %v424 = vpack.c.b16 %v417, %v416
    %v425 = vpack.c.b16 %v419, %v418
    %v426 = vpack.c.b16 %v420, %v420
    %vm432 = vcmask 687104
    %v434 = vsel %vm432, %v398, 0
    %vm436 = vcmask 1041408
    %v438 = vsel %vm436, %v426, 0
    %440 = vmatprep.subr.bf16.mxu0 0
    %441 = vmatpush1.bf16.msra.mxu0 0
    %442 = vmatprep.subr.bf16.mxu0 0
    %443 = vmatpush1.bf16.msra.mxu0 0
    %444 = vmatprep.subr.bf16.mxu0 0
    %445 = vmatpush1.bf16.msra.mxu0 %v438
    %446 = vmatprep.subr.bf16.mxu0 0
    %447 = vmatpush1.bf16.msra.mxu0 %v425
    %448 = vmatprep.subr.bf16.mxu0 0
    %449 = vmatpush1.bf16.msra.mxu0 %v424
    %450 = vmatprep.subr.bf16.mxu0 0
    %451 = vmatpush1.bf16.msra.mxu0 %v423
    %452 = vmatprep.subr.bf16.mxu0 0
    %453 = vmatpush1.bf16.msra.mxu0 %v422
    %454 = vmatprep.subr.bf16.mxu0 0
    %455 = vmatpush1.bf16.msra.mxu0 %v421
    %456 = vmatprep.subr.bf16.mxu0 0
    %457 = vmatpush2.bf16.msra.mxu0 0
    %458 = vmatprep.subr.bf16.mxu0 0
    %459 = vmatpush2.bf16.msra.mxu0 0
    %460 = vmatprep.subr.bf16.mxu0 0
    %461 = vmatpush2.bf16.msra.mxu0 0
    %462 = vmatprep.subr.bf16.mxu0 0
    %463 = vmatpush2.bf16.msra.mxu0 0
    %464 = vmatprep.subr.bf16.mxu0 0
    %465 = vmatpush2.bf16.msra.mxu0 0
    %466 = vmatprep.subr.bf16.mxu0 0
    %467 = vmatpush2.bf16.msra.mxu0 0
    %468 = vmatprep.subr.bf16.mxu0 0
    %469 = vmatpush2.bf16.msra.mxu0 0
    %470 = vmatprep.subr.bf16.mxu0 0
    %471 = vmatpush2.bf16.msra.mxu0 0
    %472 = vmatprep.mubr.bf16.mxu0 0
    %473 = vmatmul.mubr.bf16.gmra.mxu0 %v434
    %v474 = vpop.f32.mrf.mxu0
    %v475 = vadd.f32 0.0, %v474
    %v476 = vpop.f32.mrf.mxu0
    %v477 = vpop.f32.mrf.mxu0
    %v478 = vpop.f32.mrf.mxu0
    %479 = vdwg.mxu0
    %vm480 = vcmask 193536
    %v481 = vsel %vm480, %v475, 0.0
    %v482 = vrot.slane %v481, 4
    %v483 = vadd.f32 %v481, %v482
    %v484 = vrot.slane %v483, 2
    %v485 = vadd.f32 %v483, %v484
    %v486 = vrot.slane %v485, 1
    %v487 = vadd.f32 %v485, %v486
    %v488 = vmul.f32 %v475, %v475
    %v489 = vsel %vm480, %v488, 0.0
    %v490 = vrot.slane %v489, 4
    %v491 = vadd.f32 %v489, %v490
    %v492 = vrot.slane %v491, 2
    %v493 = vadd.f32 %v491, %v492
    %v494 = vrot.slane %v493, 1
    %v495 = vadd.f32 %v493, %v494
    %v496 = vld [vmem:[%s2 + $0x42] sm:$0x1]
    %v497 = vld [vmem:[%s2 + $0x43] sm:$0x1]
    %vm498 = vcmask 188416
    %499 = vst.msk [vmem:[#allocation7] sm:$0x1] %vm498, %v487
    %500 = vst.msk [vmem:[#allocation7 + $0x1] sm:$0x1] %vm498, %v495
    %v501 = vld [vmem:[%s2 + $0x22] sm:$0xff]
    %v502 = vld [vmem:[%s2 + $0x2a] sm:$0xff]
    %v503 = vld [vmem:[%s2 + $0x32] sm:$0xff]
    %v504 = vld [vmem:[#allocation7] sm:$0x3]
    %vm505 = vcmask 195584
    %v507 = vsel %vm505, %v504, 0
    %509 = vmatprep.subr.mxu0 0.0
    %510 = vmatpush1.msra.mxu0 0.0
    %511 = vmatprep.subr.mxu0 0.0
    %512 = vmatpush1.msra.mxu0 0.0
    %513 = vmatprep.subr.mxu0 0.0
    %514 = vmatpush1.msra.mxu0 0.0
    %515 = vmatprep.subr.mxu0 0.0
    %516 = vmatpush1.msra.mxu0 0.0
    %517 = vmatprep.subr.mxu0 0.0
    %518 = vmatpush1.msra.mxu0 0.0
    %519 = vmatprep.subr.mxu0 0.0
    %520 = vmatpush1.msra.mxu0 0.0
    %521 = vmatprep.subr.mxu0 0.0
    %522 = vmatpush1.msra.mxu0 0.0
    %523 = vmatprep.subr.mxu0 0.0
    %524 = vmatpush1.msra.mxu0 0.0
    %525 = vmatprep.subr.mxu0 0.0
    %526 = vmatpush1.msra.mxu0 0.0
    %527 = vmatprep.subr.mxu0 0.0
    %528 = vmatpush1.msra.mxu0 0.0
    %529 = vmatprep.subr.mxu0 0.0
    %530 = vmatpush1.msra.mxu0 0.0
    %531 = vmatprep.subr.mxu0 0.0
    %532 = vmatpush1.msra.mxu0 0.0
    %533 = vmatprep.subr.mxu0 0.0
    %534 = vmatpush1.msra.mxu0 0.0
    %535 = vmatprep.subr.mxu0 0.0
    %536 = vmatpush1.msra.mxu0 %v503
    %537 = vmatprep.subr.mxu0 0.0
    %538 = vmatpush1.msra.mxu0 %v502
    %539 = vmatprep.subr.mxu0 0.0
    %540 = vmatpush1.msra.mxu0 %v501
    %541 = vmatprep.subr.mxu0 0.0
    %542 = vmatpush2.msra.mxu0 0.0
    %543 = vmatprep.subr.mxu0 0.0
    %544 = vmatpush2.msra.mxu0 0.0
    %545 = vmatprep.subr.mxu0 0.0
    %546 = vmatpush2.msra.mxu0 0.0
    %547 = vmatprep.subr.mxu0 0.0
    %548 = vmatpush2.msra.mxu0 0.0
    %549 = vmatprep.subr.mxu0 0.0
    %550 = vmatpush2.msra.mxu0 0.0
    %551 = vmatprep.subr.mxu0 0.0
    %552 = vmatpush2.msra.mxu0 0.0
    %553 = vmatprep.subr.mxu0 0.0
    %554 = vmatpush2.msra.mxu0 0.0
    %555 = vmatprep.subr.mxu0 0.0
    %556 = vmatpush2.msra.mxu0 0.0
    %557 = vmatprep.subr.mxu0 0.0
    %558 = vmatpush2.msra.mxu0 0.0
    %559 = vmatprep.subr.mxu0 0.0
    %560 = vmatpush2.msra.mxu0 0.0
    %561 = vmatprep.subr.mxu0 0.0
    %562 = vmatpush2.msra.mxu0 0.0
    %563 = vmatprep.subr.mxu0 0.0
    %564 = vmatpush2.msra.mxu0 0.0
    %565 = vmatprep.subr.mxu0 0.0
    %566 = vmatpush2.msra.mxu0 0.0
    %567 = vmatprep.subr.mxu0 0.0
    %568 = vmatpush2.msra.mxu0 0.0
    %569 = vmatprep.subr.mxu0 0.0
    %570 = vmatpush2.msra.mxu0 0.0
    %571 = vmatprep.subr.mxu0 0.0
    %572 = vmatpush2.msra.mxu0 0.0
    %573 = vmatprep.mubr.f32.mxu0 0.0
    %574 = vmatmul.mubr.f32.gmra.mxu0 %v507
    %v575 = vpop.f32.mrf.mxu0
    %v576 = vadd.f32 0.0, %v575
    %v577 = vpop.f32.mrf.mxu0
    %578 = vdwg.mxu0
    %v579 = vmul.f32 %v576, 0.055555556
    %v580 = vmul.f32 %v579, %v579
    %v582 = vrot.slane %v580, 7
    %v584 = vsub.f32 %v579, %v582
    %v585 = vmax.f32 %v584, 0.0
    %v586 = vadd.f32 %v585, 1e-05
    %v587 = vrsqrt.pop %v586
    %v589 = vrot.slane %v587, 1
    %v591 = vmul.f32 %v496, %v589
    %v592 = vmul.f32 %v579, %v591
    %v593 = vsub.f32 %v497, %v592
    %vm594 = vcmask 57344
    %595 = vst.msk [vmem:[#allocation7] sm:$0x1] %vm594, %v591
    %596 = vst.msk [vmem:[#allocation7 + $0x1] sm:$0x1] %vm594, %v593
    %v597 = vld [vmem:[%s2 + $0x3a] sm:$0xff]
    %v598 = vld [vmem:[#allocation7] sm:$0x3]
    %vm599 = vcmask 64512
    %v601 = vsel %vm599, %v598, 0
    %603 = vmatprep.subr.mxu0 0.0
    %604 = vmatpush1.msra.mxu0 0.0
    %605 = vmatprep.subr.mxu0 0.0
    %606 = vmatpush1.msra.mxu0 0.0
    %607 = vmatprep.subr.mxu0 0.0
    %608 = vmatpush1.msra.mxu0 0.0
    %609 = vmatprep.subr.mxu0 0.0
    %610 = vmatpush1.msra.mxu0 0.0
    %611 = vmatprep.subr.mxu0 0.0
    %612 = vmatpush1.msra.mxu0 0.0
    %613 = vmatprep.subr.mxu0 0.0
    %614 = vmatpush1.msra.mxu0 0.0
    %615 = vmatprep.subr.mxu0 0.0
    %616 = vmatpush1.msra.mxu0 0.0
    %617 = vmatprep.subr.mxu0 0.0
    %618 = vmatpush1.msra.mxu0 0.0
    %619 = vmatprep.subr.mxu0 0.0
    %620 = vmatpush1.msra.mxu0 0.0
    %621 = vmatprep.subr.mxu0 0.0
    %622 = vmatpush1.msra.mxu0 0.0
    %623 = vmatprep.subr.mxu0 0.0
    %624 = vmatpush1.msra.mxu0 0.0
    %625 = vmatprep.subr.mxu0 0.0
    %626 = vmatpush1.msra.mxu0 0.0
    %627 = vmatprep.subr.mxu0 0.0
    %628 = vmatpush1.msra.mxu0 0.0
    %629 = vmatprep.subr.mxu0 0.0
    %630 = vmatpush1.msra.mxu0 0.0
    %631 = vmatprep.subr.mxu0 0.0
    %632 = vmatpush1.msra.mxu0 0.0
    %633 = vmatprep.subr.mxu0 0.0
    %634 = vmatpush1.msra.mxu0 %v597
    %635 = vmatprep.subr.mxu0 0.0
    %636 = vmatpush2.msra.mxu0 0.0
    %637 = vmatprep.subr.mxu0 0.0
    %638 = vmatpush2.msra.mxu0 0.0
    %639 = vmatprep.subr.mxu0 0.0
    %640 = vmatpush2.msra.mxu0 0.0
    %641 = vmatprep.subr.mxu0 0.0
    %642 = vmatpush2.msra.mxu0 0.0
    %643 = vmatprep.subr.mxu0 0.0
    %644 = vmatpush2.msra.mxu0 0.0
    %645 = vmatprep.subr.mxu0 0.0
    %646 = vmatpush2.msra.mxu0 0.0
    %647 = vmatprep.subr.mxu0 0.0
    %648 = vmatpush2.msra.mxu0 0.0
    %649 = vmatprep.subr.mxu0 0.0
    %650 = vmatpush2.msra.mxu0 0.0
    %651 = vmatprep.subr.mxu0 0.0
    %652 = vmatpush2.msra.mxu0 0.0
    %653 = vmatprep.subr.mxu0 0.0
    %654 = vmatpush2.msra.mxu0 0.0
    %655 = vmatprep.subr.mxu0 0.0
    %656 = vmatpush2.msra.mxu0 0.0
    %657 = vmatprep.subr.mxu0 0.0
    %658 = vmatpush2.msra.mxu0 0.0
    %659 = vmatprep.subr.mxu0 0.0
    %660 = vmatpush2.msra.mxu0 0.0
    %661 = vmatprep.subr.mxu0 0.0
    %662 = vmatpush2.msra.mxu0 0.0
    %663 = vmatprep.subr.mxu0 0.0
    %664 = vmatpush2.msra.mxu0 0.0
    %665 = vmatprep.subr.mxu0 0.0
    %666 = vmatpush2.msra.mxu0 0.0
    %667 = vmatprep.mubr.f32.mxu0 0.0
    %668 = vmatmul.mubr.f32.gmra.mxu0 %v601
    %v669 = vpop.f32.mrf.mxu0
    %v670 = vadd.f32 0.0, %v669
    %v671 = vpop.f32.mrf.mxu0
    %672 = vdwg.mxu0
    %v673 = vlaneseq
    %v674 = vshrl.u32 %v673, 7
    %v675 = vsub.s32 0, %v674
    %v676 = vrot.slane %v670, %v675
    %v677 = vmul.f32 %v475, %v676
    %v678 = vlaneseq
    %v679 = vshrl.u32 %v678, 7
    %v680 = vsub.s32 1, %v679
    %v681 = vrot.slane %v670, %v680
    %v682 = vadd.f32 %v677, %v681
    %vm683 = vcmp.ge.f32.partialorder %v682, 0.0
    %v684 = vmul.f32 %v682, 0.3
    %v685 = vsel %vm683, %v682, %v684
    %686 = vst.msk [vmem:[#allocation6] sm:$0x3f] %vm480, %v685
    %v687 = vld [vmem:[#allocation6] sm:$0x1]
    %688 = vst.msk [vmem:[#allocation4] sm:$0x1] %vm498, %v687
    %v689 = vld [vmem:[#allocation6 + $0x1] sm:$0x1]
    %691 = vrot.lane.b32.xlu0 %v689, 24
    %v692 = vpop.permute.xlu0 %691
    %vm694 = vcmask 385216
    %695 = vst.msk [vmem:[#allocation4] sm:$0x1] %vm694, %v692
    %v696 = vld [vmem:[#allocation6 + $0x2] sm:$0x1]
    %698 = vrot.lane.b32.xlu0 %v696, 48
    %v699 = vpop.permute.xlu0 %698
    %vm701 = vcmask 582016
    %702 = vst.msk [vmem:[#allocation4] sm:$0x1] %vm701, %v699
    %v703 = vld [vmem:[#allocation6 + $0x3] sm:$0x1]
    %704 = vst.msk [vmem:[#allocation4 + $0x1] sm:$0x1] %vm498, %v703
    %v705 = vld [vmem:[#allocation6 + $0x4] sm:$0x1]
    %707 = vrot.lane.b32.xlu0 %v705, 24
    %v708 = vpop.permute.xlu0 %707
    %710 = vst.msk [vmem:[#allocation4 + $0x1] sm:$0x1] %vm694, %v708
    %v711 = vld [vmem:[#allocation6 + $0x5] sm:$0x1]
    %713 = vrot.lane.b32.xlu0 %v711, 48
    %v714 = vpop.permute.xlu0 %713
    %716 = vst.msk [vmem:[#allocation4 + $0x1] sm:$0x1] %vm701, %v714
    %v717 = vld [vmem:[%s1 + $0x40] sm:$0xc]
    %v718 = vld [vmem:[%s1 + $0x44] sm:$0xf]
    %v719 = vld [vmem:[%s1 + $0x48] sm:$0xf]
    %v720 = vld [vmem:[%s1 + $0x4c] sm:$0xf]
    %v721 = vld [vmem:[%s1 + $0x50] sm:$0xf]
    %v722 = vld [vmem:[%s1 + $0x54] sm:$0xf]
    %v723 = vld [vmem:[%s1 + $0x58] sm:$0xf]
    %v724 = vld [vmem:[%s1 + $0x5c] sm:$0xf]
    %v725 = vld [vmem:[%s1 + $0x60] sm:$0xf]
    %v726 = vld [vmem:[%s1 + $0x64] sm:$0x3]
    %v727 = vld [vmem:[#allocation4] sm:$0x3]
    %v728 = vpack.c.bf16 %v727, %v727
    %v739 = vunpack.c.l.b16 %v717
    %v740 = vunpack.c.l.b16 %v718
    %v741 = vunpack.c.l.b16 %v719
    %v742 = vunpack.c.l.b16 %v720
    %v743 = vunpack.c.l.b16 %v721
    %v744 = vunpack.c.l.b16 %v722
    %v745 = vunpack.c.l.b16 %v723
    %v746 = vunpack.c.l.b16 %v724
    %v747 = vunpack.c.l.b16 %v725
    %v748 = vunpack.c.l.b16 %v726
    %v749 = vpack.c.b16 %v740, %v739
    %v750 = vpack.c.b16 %v742, %v741
    %v751 = vpack.c.b16 %v744, %v743
    %v752 = vpack.c.b16 %v746, %v745
    %v753 = vpack.c.b16 %v748, %v747
    %vm754 = vcmask 1045504
    %v755 = vrot.slane %v749, 2
    %v756 = vrot.slane %v750, 2
    %v757 = vsel %vm754, %v755, %v756
    %v758 = vrot.slane %v751, 2
    %v759 = vsel %vm754, %v756, %v758
    %v760 = vrot.slane %v752, 2
    %v761 = vsel %vm754, %v758, %v760
    %v762 = vrot.slane %v753, 2
    %v763 = vsel %vm754, %v760, %v762
    %vm768 = vcmask 588800
    %v770 = vsel %vm768, %v728, 0
    %v773 = vsel %vm159, %v762, 0
    %775 = vmatprep.subr.bf16.mxu0 0
    %776 = vmatpush1.bf16.msra.mxu0 0
    %777 = vmatprep.subr.bf16.mxu0 0
    %778 = vmatpush1.bf16.msra.mxu0 0
    %779 = vmatprep.subr.bf16.mxu0 0
    %780 = vmatpush1.bf16.msra.mxu0 0
    %781 = vmatprep.subr.bf16.mxu0 0
    %782 = vmatpush1.bf16.msra.mxu0 %v773
    %783 = vmatprep.subr.bf16.mxu0 0
    %784 = vmatpush1.bf16.msra.mxu0 %v763
    %785 = vmatprep.subr.bf16.mxu0 0
    %786 = vmatpush1.bf16.msra.mxu0 %v761
    %787 = vmatprep.subr.bf16.mxu0 0
    %788 = vmatpush1.bf16.msra.mxu0 %v759
    %789 = vmatprep.subr.bf16.mxu0 0
    %790 = vmatpush1.bf16.msra.mxu0 %v757
    %791 = vmatprep.subr.bf16.mxu0 0
    %792 = vmatpush2.bf16.msra.mxu0 0
    %793 = vmatprep.subr.bf16.mxu0 0
    %794 = vmatpush2.bf16.msra.mxu0 0
    %795 = vmatprep.subr.bf16.mxu0 0
    %796 = vmatpush2.bf16.msra.mxu0 0
    %797 = vmatprep.subr.bf16.mxu0 0
    %798 = vmatpush2.bf16.msra.mxu0 0
    %799 = vmatprep.subr.bf16.mxu0 0
    %800 = vmatpush2.bf16.msra.mxu0 0
    %801 = vmatprep.subr.bf16.mxu0 0
    %802 = vmatpush2.bf16.msra.mxu0 0
    %803 = vmatprep.subr.bf16.mxu0 0
    %804 = vmatpush2.bf16.msra.mxu0 0
    %805 = vmatprep.subr.bf16.mxu0 0
    %806 = vmatpush2.bf16.msra.mxu0 0
    %807 = vmatprep.mubr.bf16.mxu0 0
    %808 = vmatmul.mubr.bf16.gmra.mxu0 %v770
    %v809 = vpop.f32.mrf.mxu0
    %v810 = vadd.f32 0.0, %v809
    %v811 = vpop.f32.mrf.mxu0
    %v812 = vpop.f32.mrf.mxu0
    %v813 = vpop.f32.mrf.mxu0
    %814 = vdwg.mxu0
    %v815 = vsel %vm436, %v810, 0.0
    %v816 = vrot.slane %v815, 4
    %v817 = vadd.f32 %v815, %v816
    %v818 = vrot.slane %v817, 2
    %v819 = vadd.f32 %v817, %v818
    %v820 = vrot.slane %v819, 1
    %v821 = vadd.f32 %v819, %v820
    %v822 = vmul.f32 %v810, %v810
    %v823 = vsel %vm436, %v822, 0.0
    %v824 = vrot.slane %v823, 4
    %v825 = vadd.f32 %v823, %v824
    %v826 = vrot.slane %v825, 2
    %v827 = vadd.f32 %v825, %v826
    %v828 = vrot.slane %v827, 1
    %v829 = vadd.f32 %v827, %v828
    %v830 = vld [vmem:[%s2 + $0x44] sm:$0x1]
    %v831 = vld [vmem:[%s2 + $0x45] sm:$0x1]
    %v832 = vmul.f32 %v821, 0.5
    %v833 = vmul.f32 %v829, 0.5
    %v834 = vmul.f32 %v832, %v832
    %v835 = vsub.f32 %v833, %v834
    %v836 = vmax.f32 %v835, 0.0
    %v837 = vadd.f32 %v836, 1e-05
    %v838 = vrsqrt.pop %v837
    %v839 = vmul.f32 %v830, %v838
    %v840 = vmul.f32 %v832, %v839
    %v841 = vsub.f32 %v831, %v840
    %v842 = vlaneseq
    %v843 = vshrl.u32 %v842, 7
    %v844 = vsub.s32 0, %v843
    %v845 = vrot.slane %v839, %v844
    %v846 = vmul.f32 %v810, %v845
    %v847 = vlaneseq
    %v848 = vshrl.u32 %v847, 7
    %v849 = vsub.s32 0, %v848
    %v850 = vrot.slane %v841, %v849
    %v851 = vadd.f32 %v846, %v850
    %vm852 = vcmp.ge.f32.partialorder %v851, 0.0
    %v853 = vmul.f32 %v851, 0.3
    %v854 = vsel %vm852, %v851, %v853
    %855 = vst [vmem:[#allocation8] sm:$0x3] %v854
    // Predicated region
    $region14: #{encoder_small_cnn.1} parent=1 // pred_check
      _
    $region15: #{encoder_small_cnn.1} parent=1 // pred_check_branch
      %857 = sbr.rel (0) target = $region17
    $region16: #{encoder_small_cnn.1} parent=1 // pred_region
      %s859 = ssub.s32 32, 32
      %860 = vsyncadd [#allocation9], %s859
      %s862 = sshll.u32 [#allocation8], 4
      %s863 = int_to_ptr.vmem [resolvable:$true] %s862
      %865 = dma.vmem_to_hbm [thread:$0]  %s863, 32, %s3, [#allocation9]
    $region17: #{encoder_small_cnn.1} parent=1 // pred_fallthru
      _
    // Predicated region
    $region18: #{encoder_small_cnn.1} parent=1 // pred_check
      _
    $region19: #{encoder_small_cnn.1} parent=1 // pred_check_branch
      %867 = sbr.rel (0) target = $region21
    $region20: #{encoder_small_cnn.1} parent=1 // pred_region
      %868 = dma.done [#allocation9], 32
    $region21: #{encoder_small_cnn.1} parent=1 // pred_fallthru
      _
    %869 = vsyncpa [#allocation9], 1

</llo_original>
